<compile_context>
chip_gen: v5e
topology: v5e:2x2
jax: 0.10.0
libtpu: 0.0.40
codegen_flags: <defaults>
</compile_context>

<pallas_src>
import functools

import jax
import jax.numpy as jnp
from jax.experimental import pallas as pl
from jax.experimental.pallas import tpu as pltpu

HEAD_PAD = 128  # fused (advantage|value) head padded to a full 128-lane vreg


def qnetwork_kernel(x_ref, w1_ref, b1_ref, w2_ref, b2_ref, wh_ref, bh_ref,
                    out_ref, *, action_size, dueling):
    """fc1 -> relu -> fc2 -> relu -> fused head -> (optional) dueling combine."""
    x = x_ref[...]

    # fc1 + relu (bf16 operands, f32 accumulate, f32 elementwise)
    h1 = jnp.dot(x.astype(jnp.bfloat16), w1_ref[...],
                 preferred_element_type=jnp.float32) + b1_ref[...]
    h1 = jnp.maximum(h1, 0.0)

    # fc2 + relu
    h2 = jnp.dot(h1.astype(jnp.bfloat16), w2_ref[...],
                 preferred_element_type=jnp.float32) + b2_ref[...]
    h2 = jnp.maximum(h2, 0.0)

    # fused heads: columns [0, A) = advantage (or fc3), column A = value,
    # columns > A are exact zeros (zero weights and zero bias).
    y = jnp.dot(h2.astype(jnp.bfloat16), wh_ref[...],
                preferred_element_type=jnp.float32) + bh_ref[...]

    if dueling:
        val = y[:, action_size:action_size + 1]                      # [TB, 1]
        # Mean over the A *valid* advantage columns only: padded cols are
        # exactly zero, so (total row sum - value column) == sum of advantages.
        adv_mean = (jnp.sum(y, axis=1, keepdims=True) - val) * (1.0 / action_size)
        # Dueling combine; columns >= A hold junk but are sliced off by the
        # wrapper -- storing the full 128 lanes keeps the vst lane-dense.
        out_ref[...] = val + y - adv_mean
    else:
        out_ref[...] = y


def qnetwork_forward(state, params, *, dueling=True, batch_tile=128):
    """QNetwork forward. state: [B, state_size] f32 -> [B, action_size] f32."""
    if dueling:
        w1, b1, w2, b2, wv, bv, wa, ba = params
        action_size = wa.shape[1]
    else:
        w1, b1, w2, b2, w3, b3 = params
        action_size = w3.shape[1]
    batch, state_size = state.shape
    hidden = w1.shape[1]
    assert action_size + 1 <= HEAD_PAD

    # Fuse head(s) into one [H, 128] weight / [1, 128] bias (zero padding).
    wh = jnp.zeros((hidden, HEAD_PAD), dtype=w1.dtype)
    bh = jnp.zeros((1, HEAD_PAD), dtype=b1.dtype)
    if dueling:
        wh = wh.at[:, :action_size].set(wa)
        wh = wh.at[:, action_size:action_size + 1].set(wv)
        bh = bh.at[:, :action_size].set(ba)
        bh = bh.at[:, action_size:action_size + 1].set(bv)
    else:
        wh = wh.at[:, :action_size].set(w3)
        bh = bh.at[:, :action_size].set(b3)

    # Batch tiling: tile must be a multiple of 8 sublanes; pad the batch.
    tb = max(8, min(batch_tile, pl.cdiv(batch, 8) * 8))
    padded_batch = pl.cdiv(batch, tb) * tb
    if padded_batch != batch:
        state = jnp.pad(state, ((0, padded_batch - batch), (0, 0)))
    grid = (padded_batch // tb,)

    resident = lambda i: (0, 0)  # weights/biases stay put across grid steps
    out_padded = pl.pallas_call(
        functools.partial(qnetwork_kernel, action_size=action_size,
                          dueling=dueling),
        out_shape=jax.ShapeDtypeStruct((padded_batch, HEAD_PAD), jnp.float32),
        grid=grid,
        in_specs=[
            pl.BlockSpec((tb, state_size), lambda i: (i, 0)),   # state (tiled)
            pl.BlockSpec((state_size, hidden), resident),       # w1
            pl.BlockSpec((1, hidden), resident),                # b1
            pl.BlockSpec((hidden, hidden), resident),           # w2
            pl.BlockSpec((1, hidden), resident),                # b2
            pl.BlockSpec((hidden, HEAD_PAD), resident),         # fused head W
            pl.BlockSpec((1, HEAD_PAD), resident),              # fused head b
        ],
        out_specs=pl.BlockSpec((tb, HEAD_PAD), lambda i: (i, 0)),
        compiler_params=pltpu.CompilerParams(
            dimension_semantics=("parallel",)),
    )(state, w1, b1, w2, b2, wh, bh)

    # Drop padded batch rows and padded head columns (cols [0, A) = Q-values).
    return out_padded[:batch, :action_size]


def init_params(key, state_size, hidden_units, action_size, dueling=True):
    """nn.Linear-style init U(-1/sqrt(fan_in), +1/sqrt(fan_in)).

    Weights stored [in, out] (transposed from PyTorch) in bfloat16 for the
    MXU; biases kept as [1, out] float32 rows.
    """
    def linear(k, fan_in, fan_out):
        kw, kb = jax.random.split(k)
        bound = 1.0 / jnp.sqrt(jnp.float32(fan_in))
        w = jax.random.uniform(kw, (fan_in, fan_out), jnp.float32, -bound, bound)
        b = jax.random.uniform(kb, (1, fan_out), jnp.float32, -bound, bound)
        return w.astype(jnp.bfloat16), b

    k1, k2, k3, k4 = jax.random.split(key, 4)
    w1, b1 = linear(k1, state_size, hidden_units)
    w2, b2 = linear(k2, hidden_units, hidden_units)
    if dueling:
        wv, bv = linear(k3, hidden_units, 1)            # dueling value head
        wa, ba = linear(k4, hidden_units, action_size)  # dueling advantage head
        return (w1, b1, w2, b2, wv, bv, wa, ba)
    w3, b3 = linear(k3, hidden_units, action_size)      # plain fc3 head
    return (w1, b1, w2, b2, w3, b3)


def qnetwork_reference(state, params, dueling=True):
    """Pure-JAX reference mirroring the kernel's bf16-dot / f32-accum precision."""
    bf = jnp.bfloat16
    if dueling:
        w1, b1, w2, b2, wv, bv, wa, ba = params
    else:
        w1, b1, w2, b2, w3, b3 = params
    x = jnp.maximum(jnp.dot(state.astype(bf), w1,
                            preferred_element_type=jnp.float32) + b1, 0.0)
    x = jnp.maximum(jnp.dot(x.astype(bf), w2,
                            preferred_element_type=jnp.float32) + b2, 0.0)
    if dueling:
        val = jnp.dot(x.astype(bf), wv, preferred_element_type=jnp.float32) + bv
        adv = jnp.dot(x.astype(bf), wa, preferred_element_type=jnp.float32) + ba
        return val + adv - jnp.mean(adv, axis=1, keepdims=True)
    return jnp.dot(x.astype(bf), w3, preferred_element_type=jnp.float32) + b3


if __name__ == "__main__":
    state_size = 8       # e.g. LunarLander observation
    action_size = 4
    hidden_units = 64    # module default
    batch = 256          # exercises >1 batch tile (tile = 128, grid = (2,))

    key = jax.random.PRNGKey(0)
    k_params, k_state = jax.random.split(key)
    state = jax.random.normal(k_state, (batch, state_size), dtype=jnp.float32)

    # Dueling head (module default path).
    params_d = init_params(k_params, state_size, hidden_units, action_size,
                           dueling=True)
    out_d = jax.block_until_ready(
        qnetwork_forward(state, params_d, dueling=True, batch_tile=128))
    ref_d = qnetwork_reference(state, params_d, dueling=True)
    assert out_d.shape == (batch, action_size)
    assert jnp.allclose(out_d, ref_d, atol=1e-3, rtol=1e-3), "dueling mismatch"

    # Plain fc3 head (dueling=False path).
    params_p = init_params(k_params, state_size, hidden_units, action_size,
                           dueling=False)
    out_p = jax.block_until_ready(
        qnetwork_forward(state, params_p, dueling=False, batch_tile=128))
    ref_p = qnetwork_reference(state, params_p, dueling=False)
    assert out_p.shape == (batch, action_size)
    assert jnp.allclose(out_p, ref_p, atol=1e-3, rtol=1e-3), "fc3 mismatch"

    print("KERNEL_OK")
</pallas_src>

<mosaic_0001>
module attributes {stable_mosaic.version = 11 : i64} {
  func.func @qnetwork_kernel(%arg0: i32, %arg1: memref<128x8xf32, #tpu.memory_space<vmem>>, %arg2: memref<8x64xbf16, #tpu.memory_space<vmem>>, %arg3: memref<1x64xf32, #tpu.memory_space<vmem>>, %arg4: memref<64x64xbf16, #tpu.memory_space<vmem>>, %arg5: memref<1x64xf32, #tpu.memory_space<vmem>>, %arg6: memref<64x128xbf16, #tpu.memory_space<vmem>>, %arg7: memref<1x128xf32, #tpu.memory_space<vmem>>, %arg8: memref<128x128xf32, #tpu.memory_space<vmem>>) attributes {dimension_semantics = [#tpu.dimension_semantics<parallel>], iteration_bounds = array<i64: 2>, scalar_prefetch = 0 : i64, scratch_operands = 0 : i64, tpu.core_type = #tpu.core_type<tc>, window_params = [{transform_indices = @transform_0, window_bounds = array<i64: 128, 8>}, {pipeline_mode = #tpu.pipeline_mode<synchronous>, transform_indices = @transform_1, window_bounds = array<i64: 8, 64>}, {pipeline_mode = #tpu.pipeline_mode<synchronous>, transform_indices = @transform_2, window_bounds = array<i64: 1, 64>}, {pipeline_mode = #tpu.pipeline_mode<synchronous>, transform_indices = @transform_3, window_bounds = array<i64: 64, 64>}, {pipeline_mode = #tpu.pipeline_mode<synchronous>, transform_indices = @transform_4, window_bounds = array<i64: 1, 64>}, {pipeline_mode = #tpu.pipeline_mode<synchronous>, transform_indices = @transform_5, window_bounds = array<i64: 64, 128>}, {pipeline_mode = #tpu.pipeline_mode<synchronous>, transform_indices = @transform_6, window_bounds = array<i64: 1, 128>}, {transform_indices = @transform_7, window_bounds = array<i64: 128, 128>}]} {
    %c0 = arith.constant 0 : index
    %c0_0 = arith.constant 0 : index
    %0 = vector.load %arg1[%c0, %c0_0] : memref<128x8xf32, #tpu.memory_space<vmem>>, vector<128x8xf32>
    %1 = arith.truncf %0 : vector<128x8xf32> to vector<128x8xbf16>
    %c0_1 = arith.constant 0 : index
    %c0_2 = arith.constant 0 : index
    %2 = vector.load %arg2[%c0_1, %c0_2] : memref<8x64xbf16, #tpu.memory_space<vmem>>, vector<8x64xbf16>
    %cst = arith.constant dense<0.000000e+00> : vector<128x64xf32>
    %3 = tpu.matmul %1, %2, %cst {dimension_numbers = #tpu.dot_dimension_numbers<[1], [0], [0], [1], [0, 0, 1, 1], [], []>} : vector<128x8xbf16>, vector<8x64xbf16>, vector<128x64xf32> -> vector<128x64xf32>
    %c0_3 = arith.constant 0 : index
    %c0_4 = arith.constant 0 : index
    %4 = vector.load %arg3[%c0_3, %c0_4] : memref<1x64xf32, #tpu.memory_space<vmem>>, vector<1x64xf32>
    %5 = vector.broadcast %4 : vector<1x64xf32> to vector<128x64xf32>
    %6 = arith.addf %3, %5 : vector<128x64xf32>
    %cst_5 = arith.constant 0.000000e+00 : f32
    %7 = vector.broadcast %cst_5 : f32 to vector<128x64xf32>
    %8 = arith.maximumf %6, %7 : vector<128x64xf32>
    %9 = arith.truncf %8 : vector<128x64xf32> to vector<128x64xbf16>
    %c0_6 = arith.constant 0 : index
    %c0_7 = arith.constant 0 : index
    %10 = vector.load %arg4[%c0_6, %c0_7] : memref<64x64xbf16, #tpu.memory_space<vmem>>, vector<64x64xbf16>
    %cst_8 = arith.constant dense<0.000000e+00> : vector<128x64xf32>
    %11 = tpu.matmul %9, %10, %cst_8 {dimension_numbers = #tpu.dot_dimension_numbers<[1], [0], [0], [1], [0, 0, 1, 1], [], []>} : vector<128x64xbf16>, vector<64x64xbf16>, vector<128x64xf32> -> vector<128x64xf32>
    %c0_9 = arith.constant 0 : index
    %c0_10 = arith.constant 0 : index
    %12 = vector.load %arg5[%c0_9, %c0_10] : memref<1x64xf32, #tpu.memory_space<vmem>>, vector<1x64xf32>
    %13 = vector.broadcast %12 : vector<1x64xf32> to vector<128x64xf32>
    %14 = arith.addf %11, %13 : vector<128x64xf32>
    %cst_11 = arith.constant 0.000000e+00 : f32
    %15 = vector.broadcast %cst_11 : f32 to vector<128x64xf32>
    %16 = arith.maximumf %14, %15 : vector<128x64xf32>
    %17 = arith.truncf %16 : vector<128x64xf32> to vector<128x64xbf16>
    %c0_12 = arith.constant 0 : index
    %c0_13 = arith.constant 0 : index
    %18 = vector.load %arg6[%c0_12, %c0_13] : memref<64x128xbf16, #tpu.memory_space<vmem>>, vector<64x128xbf16>
    %cst_14 = arith.constant dense<0.000000e+00> : vector<128x128xf32>
    %19 = tpu.matmul %17, %18, %cst_14 {dimension_numbers = #tpu.dot_dimension_numbers<[1], [0], [0], [1], [0, 0, 1, 1], [], []>} : vector<128x64xbf16>, vector<64x128xbf16>, vector<128x128xf32> -> vector<128x128xf32>
    %c0_15 = arith.constant 0 : index
    %c0_16 = arith.constant 0 : index
    %20 = vector.load %arg7[%c0_15, %c0_16] : memref<1x128xf32, #tpu.memory_space<vmem>>, vector<1x128xf32>
    %21 = vector.broadcast %20 : vector<1x128xf32> to vector<128x128xf32>
    %22 = arith.addf %19, %21 : vector<128x128xf32>
    %23 = vector.extract_strided_slice %22 {offsets = [0, 4], sizes = [128, 1], strides = [1, 1]} : vector<128x128xf32> to vector<128x1xf32>
    %cst_17 = arith.constant dense<0.000000e+00> : vector<128xf32>
    %24 = vector.multi_reduction <add>, %22, %cst_17 [1] : vector<128x128xf32> to vector<128xf32>
    %25 = vector.shape_cast %24 : vector<128xf32> to vector<128x1xf32>
    %26 = arith.subf %25, %23 : vector<128x1xf32>
    %cst_18 = arith.constant 2.500000e-01 : f32
    %27 = vector.broadcast %cst_18 : f32 to vector<128x1xf32>
    %28 = arith.mulf %26, %27 : vector<128x1xf32>
    %29 = vector.broadcast %23 : vector<128x1xf32> to vector<128x128xf32>
    %30 = arith.addf %29, %22 : vector<128x128xf32>
    %31 = vector.broadcast %28 : vector<128x1xf32> to vector<128x128xf32>
    %32 = arith.subf %30, %31 : vector<128x128xf32>
    %c0_19 = arith.constant 0 : index
    %c0_20 = arith.constant 0 : index
    %33 = vector.load %arg8[%c0_19, %c0_20] : memref<128x128xf32, #tpu.memory_space<vmem>>, vector<128x128xf32>
    tpu.vector_store %arg8[%c0_19, %c0_20], %32 {strides = array<i32>} : memref<128x128xf32, #tpu.memory_space<vmem>>, vector<128x128xf32>,
    return
  }
  func.func @transform_0(%arg0: i32) -> (i32, i32) {
    %c0_i32 = arith.constant 0 : i32
    %c0_i32_0 = arith.constant 0 : i32
    return %arg0, %c0_i32 : i32, i32
  }
  func.func @transform_1(%arg0: i32) -> (i32, i32) {
    %c0_i32 = arith.constant 0 : i32
    %c0_i32_0 = arith.constant 0 : i32
    %c0_i32_1 = arith.constant 0 : i32
    return %c0_i32, %c0_i32_0 : i32, i32
  }
  func.func @transform_2(%arg0: i32) -> (i32, i32) {
    %c0_i32 = arith.constant 0 : i32
    %c0_i32_0 = arith.constant 0 : i32
    %c0_i32_1 = arith.constant 0 : i32
    return %c0_i32, %c0_i32_0 : i32, i32
  }
  func.func @transform_3(%arg0: i32) -> (i32, i32) {
    %c0_i32 = arith.constant 0 : i32
    %c0_i32_0 = arith.constant 0 : i32
    %c0_i32_1 = arith.constant 0 : i32
    return %c0_i32, %c0_i32_0 : i32, i32
  }
  func.func @transform_4(%arg0: i32) -> (i32, i32) {
    %c0_i32 = arith.constant 0 : i32
    %c0_i32_0 = arith.constant 0 : i32
    %c0_i32_1 = arith.constant 0 : i32
    return %c0_i32, %c0_i32_0 : i32, i32
  }
  func.func @transform_5(%arg0: i32) -> (i32, i32) {
    %c0_i32 = arith.constant 0 : i32
    %c0_i32_0 = arith.constant 0 : i32
    %c0_i32_1 = arith.constant 0 : i32
    return %c0_i32, %c0_i32_0 : i32, i32
  }
  func.func @transform_6(%arg0: i32) -> (i32, i32) {
    %c0_i32 = arith.constant 0 : i32
    %c0_i32_0 = arith.constant 0 : i32
    %c0_i32_1 = arith.constant 0 : i32
    return %c0_i32, %c0_i32_0 : i32, i32
  }
  func.func @transform_7(%arg0: i32) -> (i32, i32) {
    %c0_i32 = arith.constant 0 : i32
    %c0_i32_0 = arith.constant 0 : i32
    return %arg0, %c0_i32 : i32, i32
  }
}

</mosaic_0001>

<llo_original>
// kernel: tpu_custom_call.1
$region0: #{tpu_custom_call.1}
  #allocation0 [shape = 'u32[]', space=smem, size = 0x4, offset = 0x4, fixed_abs, tag = 'smem constant byte address 0x4 - core index']
  #allocation1 [shape = 'u32[72,128]{1,0:T(1,128)}', space=vmem, size = 0x9000, scoped, tag = 'internal scratch']
  %s0 = inlined_call_operand.vmem [shape: f32[256,8], index: 0, kind: input, shape index: {}]
  %s1 = inlined_call_operand.vmem [shape: bf16[8,64], index: 1, kind: input, shape index: {}]
  %s2 = inlined_call_operand.vmem [shape: f32[1,64], index: 2, kind: input, shape index: {}]
  %s3 = inlined_call_operand.vmem [shape: bf16[64,64], index: 3, kind: input, shape index: {}]
  %s4 = inlined_call_operand.vmem [shape: f32[1,64], index: 4, kind: input, shape index: {}]
  %s5 = inlined_call_operand.vmem [shape: bf16[64,128], index: 5, kind: input, shape index: {}]
  %s6 = inlined_call_operand.vmem [shape: f32[1,128], index: 6, kind: input, shape index: {}]
  %s7 = inlined_call_operand.hbm [shape: f32[256,128], index: 7, kind: output, shape index: {}]
  %s8 = sld [smem:[#allocation0]]
  $region61: #{tpu_custom_call.1} parent=0
    _
  %s10 = ssub.s32 1, %s8
  %s11 = scalar_select 0, %s10, %s8
  $region1: #{tpu_custom_call.1} parent=0
    #allocation2 [shape = 'u8[131072]{0}', space=vmem, size = 0x20000, scoped, tag = 'output window, operand 0']
    #allocation3 [shape = 's32[2]{0}', space=sflag, size = 0x8, scoped, tag = 'scoped memory for tpu_custom_call.1']
    %12 = vsyncpa [#allocation3], 0
    %s13 = scalar_lea.sflag [#allocation3], 1
    %14 = vsyncpa %s13, 0
    loop: start=0, step=1, limit=4
    $region2: #{tpu_custom_call.1} parent=1 // loop_pre_header
      _
    $region3: #{tpu_custom_call.1} parent=1 // loop_header
      %s16 = sphi 0, %s20
      %p17 = scmp.ge.s32.totalorder %s16, 4
      %s26 = sphi 0, %s28
      %s29 = sphi 0, %s26
      %s30 = sphi 0, %s29
      %s46 = sphi 0, %s30
      %s50 = sphi 0, %s50
      %s52 = sphi 0, %s50
      %s53 = sphi 0, %s52
      %s67 = sphi 0, %s53
      %s71 = sphi 0, %s71
      %s73 = sphi 0, %s71
      %s74 = sphi 0, %s73
      %s88 = sphi 0, %s74
      %s92 = sphi 0, %s92
      %s94 = sphi 0, %s92
      %s95 = sphi 0, %s94
      %s109 = sphi 0, %s95
      %s113 = sphi 0, %s113
      %s115 = sphi 0, %s113
      %s116 = sphi 0, %s115
      %s130 = sphi 0, %s116
      %s134 = sphi 0, %s134
      %s136 = sphi 0, %s134
      %s137 = sphi 0, %s136
      %s151 = sphi 0, %s137
      %s155 = sphi 0, %s155
      %s157 = sphi 0, %s155
      %s158 = sphi 0, %s157
      %s172 = sphi 0, %s158
      %s178 = sphi 0, %s180
      %s181 = sphi 0, %s178
      %s182 = sphi 0, %s181
      %s198 = sphi 0, %s182
    $region4: #{tpu_custom_call.1} parent=1 // loop_header_branch
      %19 = sbr.rel (%p17) target = $region8
    $region5: #{tpu_custom_call.1} parent=1 // loop_body
      %s21 = ssub.s32 %s16, 1
      %s22 = ssub.s32 %s16, 2
      %s23 = sadd.s32 %s16, 1
      %s24 = ssub.s32 %s16, %s23
      %p25 = scmp.eq.s32.totalorder %s24, 0
      %s27 = sadd.s32 %s26, 1
      %s28 = scalar_select %p25, %s26, %s27
      %p31 = pneg %p25
      %p32 = scmp.eq.s32.totalorder %s16, 1
      %p33 = por %p31, %p32
      %p34 = scmp.ne.s32.totalorder %s26, %s29
      %p35 = scmp.eq.s32.totalorder %s16, 0
      %p36 = por %p34, %p35
      %p37 = scmp.ne.s32.totalorder %s26, %s29
      %p38 = scmp.eq.s32.totalorder %s21, 1
      %p39 = por %p37, %p38
      %p40 = scmp.ne.s32.totalorder %s29, %s30
      %p41 = scmp.eq.s32.totalorder %s21, 0
      %p42 = por %p40, %p41
      %p43 = scmp.ne.s32.totalorder %s29, %s30
      %p44 = scmp.eq.s32.totalorder %s22, 1
      %p45 = por %p43, %p44
      %p47 = scmp.ne.s32.totalorder %s30, %s46
      %p48 = scmp.eq.s32.totalorder %s22, 0
      %p49 = por %p47, %p48
      %s51 = sadd.s32 %s50, 1
      %p54 = scmp.eq.s32.totalorder %s16, 1
      %p55 = scmp.ne.s32.totalorder %s50, %s52
      %p56 = scmp.eq.s32.totalorder %s16, 0
      %p57 = por %p55, %p56
      %p58 = scmp.ne.s32.totalorder %s50, %s52
      %p59 = scmp.eq.s32.totalorder %s21, 1
      %p60 = por %p58, %p59
      %p61 = scmp.ne.s32.totalorder %s52, %s53
      %p62 = scmp.eq.s32.totalorder %s21, 0
      %p63 = por %p61, %p62
      %p64 = scmp.ne.s32.totalorder %s52, %s53
      %p65 = scmp.eq.s32.totalorder %s22, 1
      %p66 = por %p64, %p65
      %p68 = scmp.ne.s32.totalorder %s53, %s67
      %p69 = scmp.eq.s32.totalorder %s22, 0
      %p70 = por %p68, %p69
      %s72 = sadd.s32 %s71, 1
      %p75 = scmp.eq.s32.totalorder %s16, 1
      %p76 = scmp.ne.s32.totalorder %s71, %s73
      %p77 = scmp.eq.s32.totalorder %s16, 0
      %p78 = por %p76, %p77
      %p79 = scmp.ne.s32.totalorder %s71, %s73
      %p80 = scmp.eq.s32.totalorder %s21, 1
      %p81 = por %p79, %p80
      %p82 = scmp.ne.s32.totalorder %s73, %s74
      %p83 = scmp.eq.s32.totalorder %s21, 0
      %p84 = por %p82, %p83
      %p85 = scmp.ne.s32.totalorder %s73, %s74
      %p86 = scmp.eq.s32.totalorder %s22, 1
      %p87 = por %p85, %p86
      %p89 = scmp.ne.s32.totalorder %s74, %s88
      %p90 = scmp.eq.s32.totalorder %s22, 0
      %p91 = por %p89, %p90
      %s93 = sadd.s32 %s92, 1
      %p96 = scmp.eq.s32.totalorder %s16, 1
      %p97 = scmp.ne.s32.totalorder %s92, %s94
      %p98 = scmp.eq.s32.totalorder %s16, 0
      %p99 = por %p97, %p98
      %p100 = scmp.ne.s32.totalorder %s92, %s94
      %p101 = scmp.eq.s32.totalorder %s21, 1
      %p102 = por %p100, %p101
      %p103 = scmp.ne.s32.totalorder %s94, %s95
      %p104 = scmp.eq.s32.totalorder %s21, 0
      %p105 = por %p103, %p104
      %p106 = scmp.ne.s32.totalorder %s94, %s95
      %p107 = scmp.eq.s32.totalorder %s22, 1
      %p108 = por %p106, %p107
      %p110 = scmp.ne.s32.totalorder %s95, %s109
      %p111 = scmp.eq.s32.totalorder %s22, 0
      %p112 = por %p110, %p111
      %s114 = sadd.s32 %s113, 1
      %p117 = scmp.eq.s32.totalorder %s16, 1
      %p118 = scmp.ne.s32.totalorder %s113, %s115
      %p119 = scmp.eq.s32.totalorder %s16, 0
      %p120 = por %p118, %p119
      %p121 = scmp.ne.s32.totalorder %s113, %s115
      %p122 = scmp.eq.s32.totalorder %s21, 1
      %p123 = por %p121, %p122
      %p124 = scmp.ne.s32.totalorder %s115, %s116
      %p125 = scmp.eq.s32.totalorder %s21, 0
      %p126 = por %p124, %p125
      %p127 = scmp.ne.s32.totalorder %s115, %s116
      %p128 = scmp.eq.s32.totalorder %s22, 1
      %p129 = por %p127, %p128
      %p131 = scmp.ne.s32.totalorder %s116, %s130
      %p132 = scmp.eq.s32.totalorder %s22, 0
      %p133 = por %p131, %p132
      %s135 = sadd.s32 %s134, 1
      %p138 = scmp.eq.s32.totalorder %s16, 1
      %p139 = scmp.ne.s32.totalorder %s134, %s136
      %p140 = scmp.eq.s32.totalorder %s16, 0
      %p141 = por %p139, %p140
      %p142 = scmp.ne.s32.totalorder %s134, %s136
      %p143 = scmp.eq.s32.totalorder %s21, 1
      %p144 = por %p142, %p143
      %p145 = scmp.ne.s32.totalorder %s136, %s137
      %p146 = scmp.eq.s32.totalorder %s21, 0
      %p147 = por %p145, %p146
      %p148 = scmp.ne.s32.totalorder %s136, %s137
      %p149 = scmp.eq.s32.totalorder %s22, 1
      %p150 = por %p148, %p149
      %p152 = scmp.ne.s32.totalorder %s137, %s151
      %p153 = scmp.eq.s32.totalorder %s22, 0
      %p154 = por %p152, %p153
      %s156 = sadd.s32 %s155, 1
      %p159 = scmp.eq.s32.totalorder %s16, 1
      %p160 = scmp.ne.s32.totalorder %s155, %s157
      %p161 = scmp.eq.s32.totalorder %s16, 0
      %p162 = por %p160, %p161
      %p163 = scmp.ne.s32.totalorder %s155, %s157
      %p164 = scmp.eq.s32.totalorder %s21, 1
      %p165 = por %p163, %p164
      %p166 = scmp.ne.s32.totalorder %s157, %s158
      %p167 = scmp.eq.s32.totalorder %s21, 0
      %p168 = por %p166, %p167
      %p169 = scmp.ne.s32.totalorder %s157, %s158
      %p170 = scmp.eq.s32.totalorder %s22, 1
      %p171 = por %p169, %p170
      %p173 = scmp.ne.s32.totalorder %s158, %s172
      %p174 = scmp.eq.s32.totalorder %s22, 0
      %p175 = por %p173, %p174
      %s176 = ssub.s32 %s16, %s23
      %p177 = scmp.eq.s32.totalorder %s176, 0
      %s179 = sadd.s32 %s178, 1
      %s180 = scalar_select %p177, %s178, %s179
      %p183 = pneg %p177
      %p184 = scmp.eq.s32.totalorder %s16, 1
      %p185 = por %p183, %p184
      %p186 = scmp.ne.s32.totalorder %s178, %s181
      %p187 = scmp.eq.s32.totalorder %s16, 0
      %p188 = por %p186, %p187
      %p189 = scmp.ne.s32.totalorder %s178, %s181
      %p190 = scmp.eq.s32.totalorder %s21, 1
      %p191 = por %p189, %p190
      %p192 = scmp.ne.s32.totalorder %s181, %s182
      %p193 = scmp.eq.s32.totalorder %s21, 0
      %p194 = por %p192, %p193
      %p195 = scmp.ne.s32.totalorder %s181, %s182
      %p196 = scmp.eq.s32.totalorder %s22, 1
      %p197 = por %p195, %p196
      %p199 = scmp.ne.s32.totalorder %s182, %s198
      %p200 = scmp.eq.s32.totalorder %s22, 0
      %p201 = por %p199, %p200
      %p202 = scmp.le.s32.totalorder 1, %s16
      %p203 = scmp.lt.s32.totalorder %s16, 3
      %p204 = pnand %p202, %p203
      %p205 = pneg %p204
      // Predicated region
      $region9: #{tpu_custom_call.1} parent=5 // pred_check
        _
      $region10: #{tpu_custom_call.1} parent=5 // pred_check_branch
        %207 = sbr.rel (%p204) target = $region12
      $region11: #{tpu_custom_call.1} parent=5 // pred_region
        %s208 = ssub.s32 %s16, 1
        // Predicated region
        $region13: #{tpu_custom_call.1} parent=11 // pred_check
          %p209 = pneg %p63
        $region14: #{tpu_custom_call.1} parent=11 // pred_check_branch
          %211 = sbr.rel (%p209) target = $region16
        $region15: #{tpu_custom_call.1} parent=11 // pred_region
          _
        $region16: #{tpu_custom_call.1} parent=11 // pred_fallthru
          _
        // Predicated region
        $region17: #{tpu_custom_call.1} parent=11 // pred_check
          %p212 = pneg %p84
        $region18: #{tpu_custom_call.1} parent=11 // pred_check_branch
          %214 = sbr.rel (%p212) target = $region20
        $region19: #{tpu_custom_call.1} parent=11 // pred_region
          _
        $region20: #{tpu_custom_call.1} parent=11 // pred_fallthru
          _
        // Predicated region
        $region21: #{tpu_custom_call.1} parent=11 // pred_check
          %p215 = pneg %p105
        $region22: #{tpu_custom_call.1} parent=11 // pred_check_branch
          %217 = sbr.rel (%p215) target = $region24
        $region23: #{tpu_custom_call.1} parent=11 // pred_region
          _
        $region24: #{tpu_custom_call.1} parent=11 // pred_fallthru
          _
        // Predicated region
        $region25: #{tpu_custom_call.1} parent=11 // pred_check
          %p218 = pneg %p126
        $region26: #{tpu_custom_call.1} parent=11 // pred_check_branch
          %220 = sbr.rel (%p218) target = $region28
        $region27: #{tpu_custom_call.1} parent=11 // pred_region
          _
        $region28: #{tpu_custom_call.1} parent=11 // pred_fallthru
          _
        // Predicated region
        $region29: #{tpu_custom_call.1} parent=11 // pred_check
          %p221 = pneg %p147
        $region30: #{tpu_custom_call.1} parent=11 // pred_check_branch
          %223 = sbr.rel (%p221) target = $region32
        $region31: #{tpu_custom_call.1} parent=11 // pred_region
          _
        $region32: #{tpu_custom_call.1} parent=11 // pred_fallthru
          _
        // Predicated region
        $region33: #{tpu_custom_call.1} parent=11 // pred_check
          %p224 = pneg %p168
        $region34: #{tpu_custom_call.1} parent=11 // pred_check_branch
          %226 = sbr.rel (%p224) target = $region36
        $region35: #{tpu_custom_call.1} parent=11 // pred_region
          _
        $region36: #{tpu_custom_call.1} parent=11 // pred_fallthru
          _
      $region12: #{tpu_custom_call.1} parent=5 // pred_fallthru
        _
      %p227 = scmp.lt.s32.totalorder %s16, 2
      // Predicated region
      $region37: #{tpu_custom_call.1} parent=5 // pred_check
        %p228 = pneg %p227
      $region38: #{tpu_custom_call.1} parent=5 // pred_check_branch
        %230 = sbr.rel (%p228) target = $region40
      $region39: #{tpu_custom_call.1} parent=5 // pred_region
        // Predicated region
        $region41: #{tpu_custom_call.1} parent=39 // pred_check
          %p231 = pneg %p36
        $region42: #{tpu_custom_call.1} parent=39 // pred_check_branch
          %233 = sbr.rel (%p231) target = $region44
        $region43: #{tpu_custom_call.1} parent=39 // pred_region
          %s234 = smul.u32 16, %s16
          %p235 = scmp.lt.s32.totalorder %s234, 31
          %s236 = scalar_select %p235, %s234, 31
          %s237 = smul.addr %s236, 8
          %s238 = scalar_lea.vmem %s0, %s237
          %s239 = smul.u32 16, %s16
        $region44: #{tpu_custom_call.1} parent=39 // pred_fallthru
          _
      $region40: #{tpu_custom_call.1} parent=5 // pred_fallthru
        _
      %p240 = scmp.le.s32.totalorder 1, %s16
      %p241 = scmp.lt.s32.totalorder %s16, 3
      %p242 = pnand %p240, %p241
      %p243 = pneg %p242
      // Predicated region
      $region45: #{tpu_custom_call.1} parent=5 // pred_check
        _
      $region46: #{tpu_custom_call.1} parent=5 // pred_check_branch
        %245 = sbr.rel (%p242) target = $region48
      $region47: #{tpu_custom_call.1} parent=5 // pred_region
        %s246 = ssub.s32 %s16, 1
        %s247 = smul.u32 16, %s21
        %p248 = scmp.lt.s32.totalorder %s247, 31
        %s249 = scalar_select %p248, %s247, 31
        %s250 = smul.addr %s249, 8
        %s251 = scalar_lea.vmem %s0, %s250
        %p252 = pneg %p42
        %p253 = pneg %p39
        %p254 = pneg %p63
        %p255 = pneg %p60
        %p256 = pneg %p84
        %p257 = pneg %p81
        %p258 = pneg %p105
        %p259 = pneg %p102
        %p260 = pneg %p126
        %p261 = pneg %p123
        %p262 = pneg %p147
        %p263 = pneg %p144
        %p264 = pneg %p168
        %p265 = pneg %p165
        %p266 = pneg %p194
        %p267 = pneg %p191
        %s268 = sand.u32 %s181, 1
        %s269 = scalar_lea.sflag [#allocation3], %s268
        %s270 = sand.u32 %s181, 1
        %s271 = smul.addr %s270, 128
        %s272 = scalar_lea.vmem [#allocation2], %s271
        %s273 = smul.u32 16, %s21
        %p274 = scmp.lt.s32.totalorder %s273, 31
        %s275 = scalar_select %p274, %s273, 31
        %s276 = smul.addr %s275, 8
        %s277 = scalar_lea.vmem %s0, %s276
        %s278 = smul.u32 16, %s21
        %s279 = smul.u32 16, %s21
        %v281 = vld [vmem:[%s277] sm:$0xff]
        %v282 = vld [vmem:[%s277 + $0x8] sm:$0xff]
        %v283 = vld [vmem:[%s277 + $0x10] sm:$0xff]
        %v284 = vld [vmem:[%s277 + $0x18] sm:$0xff]
        %v285 = vld [vmem:[%s277 + $0x20] sm:$0xff]
        %v286 = vld [vmem:[%s277 + $0x28] sm:$0xff]
        %v287 = vld [vmem:[%s277 + $0x30] sm:$0xff]
        %v288 = vld [vmem:[%s277 + $0x38] sm:$0xff]
        %v289 = vld [vmem:[%s277 + $0x40] sm:$0xff]
        %v290 = vld [vmem:[%s277 + $0x48] sm:$0xff]
        %v291 = vld [vmem:[%s277 + $0x50] sm:$0xff]
        %v292 = vld [vmem:[%s277 + $0x58] sm:$0xff]
        %v293 = vld [vmem:[%s277 + $0x60] sm:$0xff]
        %v294 = vld [vmem:[%s277 + $0x68] sm:$0xff]
        %v295 = vld [vmem:[%s277 + $0x70] sm:$0xff]
        %v296 = vld [vmem:[%s277 + $0x78] sm:$0xff]
        %v297 = vpack.c.bf16 %v282, %v281
        %v298 = vpack.c.bf16 %v284, %v283
        %v299 = vpack.c.bf16 %v286, %v285
        %v300 = vpack.c.bf16 %v288, %v287
        %v301 = vpack.c.bf16 %v290, %v289
        %v302 = vpack.c.bf16 %v292, %v291
        %v303 = vpack.c.bf16 %v294, %v293
        %v304 = vpack.c.bf16 %v296, %v295
        %v305 = vld [vmem:[%s1] sm:$0xf]
        %v306 = vld [vmem:[%s2] sm:$0x1]
        %v308 = vperm.slane %v306, 0
        %vm310 = vcmask 64512
        %v312 = vsel %vm310, %v297, 0
        %v315 = vsel %vm310, %v298, 0
        %v318 = vsel %vm310, %v299, 0
        %v321 = vsel %vm310, %v300, 0
        %v324 = vsel %vm310, %v301, 0
        %v327 = vsel %vm310, %v302, 0
        %v330 = vsel %vm310, %v303, 0
        %v333 = vsel %vm310, %v304, 0
        %vm335 = vcmask 1043456
        %v337 = vsel %vm335, %v305, 0
        %339 = vmatpush.bf16.msra.mxu0 0
        %340 = vmatpush.bf16.msra.mxu0 0
        %341 = vmatpush.bf16.msra.mxu0 0
        %342 = vmatpush.bf16.msra.mxu0 0
        %343 = vmatpush.bf16.msra.mxu0 0
        %344 = vmatpush.bf16.msra.mxu0 0
        %345 = vmatpush.bf16.msra.mxu0 0
        %346 = vmatpush.bf16.msra.mxu0 %v337
        %347 = vmatmul.bf16.gmra.mxu0 %v312
        %v348 = vpop.f32.mrf.mxu0
        %v349 = vadd.f32 %v308, %v348
        %v350 = vpop.f32.mrf.mxu0
        %v351 = vadd.f32 %v308, %v350
        %352 = vmatmul.bf16.gmra.mxu0 %v315
        %v353 = vpop.f32.mrf.mxu0
        %v354 = vadd.f32 %v308, %v353
        %v355 = vpop.f32.mrf.mxu0
        %v356 = vadd.f32 %v308, %v355
        %357 = vmatmul.bf16.gmra.mxu0 %v318
        %v358 = vpop.f32.mrf.mxu0
        %v359 = vadd.f32 %v308, %v358
        %v360 = vpop.f32.mrf.mxu0
        %v361 = vadd.f32 %v308, %v360
        %362 = vmatmul.bf16.gmra.mxu0 %v321
        %v363 = vpop.f32.mrf.mxu0
        %v364 = vadd.f32 %v308, %v363
        %v365 = vpop.f32.mrf.mxu0
        %v366 = vadd.f32 %v308, %v365
        %367 = vmatmul.bf16.gmra.mxu0 %v324
        %v368 = vpop.f32.mrf.mxu0
        %v369 = vadd.f32 %v308, %v368
        %v370 = vpop.f32.mrf.mxu0
        %v371 = vadd.f32 %v308, %v370
        %372 = vmatmul.bf16.gmra.mxu0 %v327
        %v373 = vpop.f32.mrf.mxu0
        %v374 = vadd.f32 %v308, %v373
        %v375 = vpop.f32.mrf.mxu0
        %v376 = vadd.f32 %v308, %v375
        %377 = vmatmul.bf16.gmra.mxu0 %v330
        %v378 = vpop.f32.mrf.mxu0
        %v379 = vadd.f32 %v308, %v378
        %v380 = vpop.f32.mrf.mxu0
        %v381 = vadd.f32 %v308, %v380
        %382 = vmatmul.bf16.gmra.mxu0 %v333
        %v383 = vpop.f32.mrf.mxu0
        %v384 = vadd.f32 %v308, %v383
        %v385 = vpop.f32.mrf.mxu0
        %v386 = vadd.f32 %v308, %v385
        %387 = vdwg.mxu0
        %v388 = vmax.f32 %v349, 0.0
        %v389 = vmax.f32 %v351, 0.0
        %v390 = vmax.f32 %v354, 0.0
        %v391 = vmax.f32 %v356, 0.0
        %v392 = vmax.f32 %v359, 0.0
        %v393 = vmax.f32 %v361, 0.0
        %v394 = vmax.f32 %v364, 0.0
        %v395 = vmax.f32 %v366, 0.0
        %v396 = vmax.f32 %v369, 0.0
        %v397 = vmax.f32 %v371, 0.0
        %v398 = vmax.f32 %v374, 0.0
        %v399 = vmax.f32 %v376, 0.0
        %v400 = vmax.f32 %v379, 0.0
        %v401 = vmax.f32 %v381, 0.0
        %v402 = vmax.f32 %v384, 0.0
        %v403 = vmax.f32 %v386, 0.0
        %v404 = vpack.c.bf16 %v389, %v388
        %v405 = vpack.c.bf16 %v391, %v390
        %v406 = vpack.c.bf16 %v393, %v392
        %v407 = vpack.c.bf16 %v395, %v394
        %v408 = vpack.c.bf16 %v397, %v396
        %v409 = vpack.c.bf16 %v399, %v398
        %v410 = vpack.c.bf16 %v401, %v400
        %v411 = vpack.c.bf16 %v403, %v402
        %v412 = vld [vmem:[%s3] sm:$0xf]
        %v413 = vld [vmem:[%s3 + $0x4] sm:$0xf]
        %v414 = vld [vmem:[%s3 + $0x8] sm:$0xf]
        %v415 = vld [vmem:[%s3 + $0xc] sm:$0xf]
        %v416 = vld [vmem:[%s3 + $0x10] sm:$0xf]
        %v417 = vld [vmem:[%s3 + $0x14] sm:$0xf]
        %v418 = vld [vmem:[%s3 + $0x18] sm:$0xf]
        %v419 = vld [vmem:[%s3 + $0x1c] sm:$0xf]
        %v420 = vld [vmem:[%s4] sm:$0x1]
        %v422 = vperm.slane %v420, 0
        %v432 = vunpack.c.l.b16 %v412
        %v433 = vunpack.c.l.b16 %v413
        %v434 = vunpack.c.l.b16 %v414
        %v435 = vunpack.c.l.b16 %v415
        %v436 = vunpack.c.l.b16 %v416
        %v437 = vunpack.c.l.b16 %v417
        %v438 = vunpack.c.l.b16 %v418
        %v439 = vunpack.c.l.b16 %v419
        %v440 = vpack.c.b16 %v433, %v432
        %v441 = vpack.c.b16 %v435, %v434
        %v442 = vpack.c.b16 %v437, %v436
        %v443 = vpack.c.b16 %v439, %v438
        %vm448 = vcmask 523264
        %v450 = vsel %vm448, %v404, 0
        %v453 = vsel %vm448, %v405, 0
        %v456 = vsel %vm448, %v406, 0
        %v459 = vsel %vm448, %v407, 0
        %v462 = vsel %vm448, %v408, 0
        %v465 = vsel %vm448, %v409, 0
        %v468 = vsel %vm448, %v410, 0
        %v471 = vsel %vm448, %v411, 0
        %473 = vmatpush.bf16.msra.mxu0 0
        %474 = vmatpush.bf16.msra.mxu0 0
        %475 = vmatpush.bf16.msra.mxu0 0
        %476 = vmatpush.bf16.msra.mxu0 0
        %477 = vmatpush.bf16.msra.mxu0 %v443
        %478 = vmatpush.bf16.msra.mxu0 %v442
        %479 = vmatpush.bf16.msra.mxu0 %v441
        %480 = vmatpush.bf16.msra.mxu0 %v440
        %481 = vmatmul.bf16.gmra.mxu0 %v450
        %v482 = vpop.f32.mrf.mxu0
        %v483 = vadd.f32 %v422, %v482
        %v484 = vpop.f32.mrf.mxu0
        %v485 = vadd.f32 %v422, %v484
        %486 = vmatmul.bf16.gmra.mxu0 %v453
        %v487 = vpop.f32.mrf.mxu0
        %v488 = vadd.f32 %v422, %v487
        %v489 = vpop.f32.mrf.mxu0
        %v490 = vadd.f32 %v422, %v489
        %491 = vmatmul.bf16.gmra.mxu0 %v456
        %v492 = vpop.f32.mrf.mxu0
        %v493 = vadd.f32 %v422, %v492
        %v494 = vpop.f32.mrf.mxu0
        %v495 = vadd.f32 %v422, %v494
        %496 = vmatmul.bf16.gmra.mxu0 %v459
        %v497 = vpop.f32.mrf.mxu0
        %v498 = vadd.f32 %v422, %v497
        %v499 = vpop.f32.mrf.mxu0
        %v500 = vadd.f32 %v422, %v499
        %501 = vmatmul.bf16.gmra.mxu0 %v462
        %v502 = vpop.f32.mrf.mxu0
        %v503 = vadd.f32 %v422, %v502
        %v504 = vpop.f32.mrf.mxu0
        %v505 = vadd.f32 %v422, %v504
        %506 = vmatmul.bf16.gmra.mxu0 %v465
        %v507 = vpop.f32.mrf.mxu0
        %v508 = vadd.f32 %v422, %v507
        %v509 = vpop.f32.mrf.mxu0
        %v510 = vadd.f32 %v422, %v509
        %511 = vmatmul.bf16.gmra.mxu0 %v468
        %v512 = vpop.f32.mrf.mxu0
        %v513 = vadd.f32 %v422, %v512
        %v514 = vpop.f32.mrf.mxu0
        %v515 = vadd.f32 %v422, %v514
        %516 = vmatmul.bf16.gmra.mxu0 %v471
        %v517 = vpop.f32.mrf.mxu0
        %v518 = vadd.f32 %v422, %v517
        %v519 = vpop.f32.mrf.mxu0
        %v520 = vadd.f32 %v422, %v519
        %521 = vdwg.mxu0
        %v522 = vmax.f32 %v483, 0.0
        %v523 = vmax.f32 %v485, 0.0
        %v524 = vmax.f32 %v488, 0.0
        %v525 = vmax.f32 %v490, 0.0
        %v526 = vmax.f32 %v493, 0.0
        %v527 = vmax.f32 %v495, 0.0
        %v528 = vmax.f32 %v498, 0.0
        %v529 = vmax.f32 %v500, 0.0
        %v530 = vmax.f32 %v503, 0.0
        %v531 = vmax.f32 %v505, 0.0
        %v532 = vmax.f32 %v508, 0.0
        %v533 = vmax.f32 %v510, 0.0
        %v534 = vmax.f32 %v513, 0.0
        %v535 = vmax.f32 %v515, 0.0
        %v536 = vmax.f32 %v518, 0.0
        %v537 = vmax.f32 %v520, 0.0
        %v538 = vpack.c.bf16 %v523, %v522
        %v539 = vpack.c.bf16 %v525, %v524
        %v540 = vpack.c.bf16 %v527, %v526
        %v541 = vpack.c.bf16 %v529, %v528
        %v542 = vpack.c.bf16 %v531, %v530
        %v543 = vpack.c.bf16 %v533, %v532
        %v544 = vpack.c.bf16 %v535, %v534
        %v545 = vpack.c.bf16 %v537, %v536
        %v546 = vld [vmem:[%s5] sm:$0xf]
        %v547 = vld [vmem:[%s5 + $0x4] sm:$0xf]
        %v548 = vld [vmem:[%s5 + $0x8] sm:$0xf]
        %v549 = vld [vmem:[%s5 + $0xc] sm:$0xf]
        %v550 = vld [vmem:[%s5 + $0x10] sm:$0xf]
        %v551 = vld [vmem:[%s5 + $0x14] sm:$0xf]
        %v552 = vld [vmem:[%s5 + $0x18] sm:$0xf]
        %v553 = vld [vmem:[%s5 + $0x1c] sm:$0xf]
        %v554 = vld [vmem:[%s6] sm:$0x1]
        %v556 = vperm.slane %v554, 0
        %v566 = vunpack.c.l.b16 %v546
        %v567 = vunpack.c.l.b16 %v547
        %v568 = vunpack.c.l.b16 %v548
        %v569 = vunpack.c.l.b16 %v549
        %v570 = vunpack.c.l.b16 %v550
        %v571 = vunpack.c.l.b16 %v551
        %v572 = vunpack.c.l.b16 %v552
        %v573 = vunpack.c.l.b16 %v553
        %v574 = vpack.c.b16 %v567, %v566
        %v575 = vpack.c.b16 %v569, %v568
        %v576 = vpack.c.b16 %v571, %v570
        %v577 = vpack.c.b16 %v573, %v572
        %v583 = vsel %vm448, %v538, 0
        %v586 = vsel %vm448, %v539, 0
        %v589 = vsel %vm448, %v540, 0
        %v592 = vsel %vm448, %v541, 0
        %v595 = vsel %vm448, %v542, 0
        %v598 = vsel %vm448, %v543, 0
        %v601 = vsel %vm448, %v544, 0
        %v604 = vsel %vm448, %v545, 0
        %606 = vmatpush.bf16.msra.mxu0 0
        %607 = vmatpush.bf16.msra.mxu0 0
        %608 = vmatpush.bf16.msra.mxu0 0
        %609 = vmatpush.bf16.msra.mxu0 0
        %610 = vmatpush.bf16.msra.mxu0 %v577
        %611 = vmatpush.bf16.msra.mxu0 %v576
        %612 = vmatpush.bf16.msra.mxu0 %v575
        %613 = vmatpush.bf16.msra.mxu0 %v574
        %614 = vmatmul.bf16.gmra.mxu0 %v583
        %v615 = vpop.f32.mrf.mxu0
        %v616 = vadd.f32 %v556, %v615
        %v617 = vpop.f32.mrf.mxu0
        %v618 = vadd.f32 %v556, %v617
        %619 = vmatmul.bf16.gmra.mxu0 %v586
        %v620 = vpop.f32.mrf.mxu0
        %v621 = vadd.f32 %v556, %v620
        %v622 = vpop.f32.mrf.mxu0
        %v623 = vadd.f32 %v556, %v622
        %624 = vmatmul.bf16.gmra.mxu0 %v589
        %v625 = vpop.f32.mrf.mxu0
        %v626 = vadd.f32 %v556, %v625
        %v627 = vpop.f32.mrf.mxu0
        %v628 = vadd.f32 %v556, %v627
        %629 = vmatmul.bf16.gmra.mxu0 %v592
        %v630 = vpop.f32.mrf.mxu0
        %v631 = vadd.f32 %v556, %v630
        %v632 = vpop.f32.mrf.mxu0
        %v633 = vadd.f32 %v556, %v632
        %634 = vmatmul.bf16.gmra.mxu0 %v595
        %v635 = vpop.f32.mrf.mxu0
        %v636 = vadd.f32 %v556, %v635
        %v637 = vpop.f32.mrf.mxu0
        %v638 = vadd.f32 %v556, %v637
        %639 = vmatmul.bf16.gmra.mxu0 %v598
        %v640 = vpop.f32.mrf.mxu0
        %v641 = vadd.f32 %v556, %v640
        %v642 = vpop.f32.mrf.mxu0
        %v643 = vadd.f32 %v556, %v642
        %644 = vmatmul.bf16.gmra.mxu0 %v601
        %v645 = vpop.f32.mrf.mxu0
        %v646 = vadd.f32 %v556, %v645
        %v647 = vpop.f32.mrf.mxu0
        %v648 = vadd.f32 %v556, %v647
        %649 = vmatmul.bf16.gmra.mxu0 %v604
        %v650 = vpop.f32.mrf.mxu0
        %v651 = vadd.f32 %v556, %v650
        %v652 = vpop.f32.mrf.mxu0
        %v653 = vadd.f32 %v556, %v652
        %654 = vdwg.mxu0
        %655 = vadd.xlane.f32.xlu0 %v616
        %v656 = vpop.xlane.xlu0 %655
        %657 = vadd.xlane.f32.xlu0 %v618
        %v658 = vpop.xlane.xlu0 %657
        %659 = vadd.xlane.f32.xlu0 %v621
        %v660 = vpop.xlane.xlu0 %659
        %661 = vadd.xlane.f32.xlu0 %v623
        %v662 = vpop.xlane.xlu0 %661
        %663 = vadd.xlane.f32.xlu0 %v626
        %v664 = vpop.xlane.xlu0 %663
        %665 = vadd.xlane.f32.xlu0 %v628
        %v666 = vpop.xlane.xlu0 %665
        %667 = vadd.xlane.f32.xlu0 %v631
        %v668 = vpop.xlane.xlu0 %667
        %669 = vadd.xlane.f32.xlu0 %v633
        %v670 = vpop.xlane.xlu0 %669
        %671 = vadd.xlane.f32.xlu0 %v636
        %v672 = vpop.xlane.xlu0 %671
        %673 = vadd.xlane.f32.xlu0 %v638
        %v674 = vpop.xlane.xlu0 %673
        %675 = vadd.xlane.f32.xlu0 %v641
        %v676 = vpop.xlane.xlu0 %675
        %677 = vadd.xlane.f32.xlu0 %v643
        %v678 = vpop.xlane.xlu0 %677
        %679 = vadd.xlane.f32.xlu0 %v646
        %v680 = vpop.xlane.xlu0 %679
        %681 = vadd.xlane.f32.xlu0 %v648
        %v682 = vpop.xlane.xlu0 %681
        %683 = vadd.xlane.f32.xlu0 %v651
        %v684 = vpop.xlane.xlu0 %683
        %685 = vadd.xlane.f32.xlu0 %v653
        %v686 = vpop.xlane.xlu0 %685
        %v687 = vsub.f32 %v656, %v616
        %v688 = vsub.f32 %v658, %v618
        %v689 = vsub.f32 %v660, %v621
        %v690 = vsub.f32 %v662, %v623
        %v691 = vsub.f32 %v664, %v626
        %v692 = vsub.f32 %v666, %v628
        %v693 = vsub.f32 %v668, %v631
        %v694 = vsub.f32 %v670, %v633
        %v695 = vsub.f32 %v672, %v636
        %v696 = vsub.f32 %v674, %v638
        %v697 = vsub.f32 %v676, %v641
        %v698 = vsub.f32 %v678, %v643
        %v699 = vsub.f32 %v680, %v646
        %v700 = vsub.f32 %v682, %v648
        %v701 = vsub.f32 %v684, %v651
        %v702 = vsub.f32 %v686, %v653
        %v703 = vmul.f32 %v687, 0.25
        %v704 = vmul.f32 %v688, 0.25
        %v705 = vmul.f32 %v689, 0.25
        %v706 = vmul.f32 %v690, 0.25
        %v707 = vmul.f32 %v691, 0.25
        %v708 = vmul.f32 %v692, 0.25
        %v709 = vmul.f32 %v693, 0.25
        %v710 = vmul.f32 %v694, 0.25
        %v711 = vmul.f32 %v695, 0.25
        %v712 = vmul.f32 %v696, 0.25
        %v713 = vmul.f32 %v697, 0.25
        %v714 = vmul.f32 %v698, 0.25
        %v715 = vmul.f32 %v699, 0.25
        %v716 = vmul.f32 %v700, 0.25
        %v717 = vmul.f32 %v701, 0.25
        %v718 = vmul.f32 %v702, 0.25
        %720 = vset.pattern.permute.xlu0 4
        %721 = vperm.xlu0 %720, %v616
        %v722 = vpop.permute.xlu0 %721
        %725 = vset.pattern.permute.xlu0 4
        %726 = vperm.xlu0 %725, %v618
        %v727 = vpop.permute.xlu0 %726
        %730 = vset.pattern.permute.xlu0 4
        %731 = vperm.xlu0 %730, %v621
        %v732 = vpop.permute.xlu0 %731
        %735 = vset.pattern.permute.xlu0 4
        %736 = vperm.xlu0 %735, %v623
        %v737 = vpop.permute.xlu0 %736
        %740 = vset.pattern.permute.xlu0 4
        %741 = vperm.xlu0 %740, %v626
        %v742 = vpop.permute.xlu0 %741
        %745 = vset.pattern.permute.xlu0 4
        %746 = vperm.xlu0 %745, %v628
        %v747 = vpop.permute.xlu0 %746
        %750 = vset.pattern.permute.xlu0 4
        %751 = vperm.xlu0 %750, %v631
        %v752 = vpop.permute.xlu0 %751
        %755 = vset.pattern.permute.xlu0 4
        %756 = vperm.xlu0 %755, %v633
        %v757 = vpop.permute.xlu0 %756
        %760 = vset.pattern.permute.xlu0 4
        %761 = vperm.xlu0 %760, %v636
        %v762 = vpop.permute.xlu0 %761
        %765 = vset.pattern.permute.xlu0 4
        %766 = vperm.xlu0 %765, %v638
        %v767 = vpop.permute.xlu0 %766
        %770 = vset.pattern.permute.xlu0 4
        %771 = vperm.xlu0 %770, %v641
        %v772 = vpop.permute.xlu0 %771
        %775 = vset.pattern.permute.xlu0 4
        %776 = vperm.xlu0 %775, %v643
        %v777 = vpop.permute.xlu0 %776
        %780 = vset.pattern.permute.xlu0 4
        %781 = vperm.xlu0 %780, %v646
        %v782 = vpop.permute.xlu0 %781
        %785 = vset.pattern.permute.xlu0 4
        %786 = vperm.xlu0 %785, %v648
        %v787 = vpop.permute.xlu0 %786
        %790 = vset.pattern.permute.xlu0 4
        %791 = vperm.xlu0 %790, %v651
        %v792 = vpop.permute.xlu0 %791
        %795 = vset.pattern.permute.xlu0 4
        %796 = vperm.xlu0 %795, %v653
        %v797 = vpop.permute.xlu0 %796
        %v799 = vadd.f32 %v722, %v616
        %v800 = vadd.f32 %v727, %v618
        %v801 = vadd.f32 %v732, %v621
        %v802 = vadd.f32 %v737, %v623
        %v803 = vadd.f32 %v742, %v626
        %v804 = vadd.f32 %v747, %v628
        %v805 = vadd.f32 %v752, %v631
        %v806 = vadd.f32 %v757, %v633
        %v807 = vadd.f32 %v762, %v636
        %v808 = vadd.f32 %v767, %v638
        %v809 = vadd.f32 %v772, %v641
        %v810 = vadd.f32 %v777, %v643
        %v811 = vadd.f32 %v782, %v646
        %v812 = vadd.f32 %v787, %v648
        %v813 = vadd.f32 %v792, %v651
        %v814 = vadd.f32 %v797, %v653
        %816 = vset.pattern.permute.xlu0 4
        %817 = vperm.xlu0 %816, %v703
        %v818 = vpop.permute.xlu0 %817
        %821 = vset.pattern.permute.xlu0 4
        %822 = vperm.xlu0 %821, %v704
        %v823 = vpop.permute.xlu0 %822
        %826 = vset.pattern.permute.xlu0 4
        %827 = vperm.xlu0 %826, %v705
        %v828 = vpop.permute.xlu0 %827
        %831 = vset.pattern.permute.xlu0 4
        %832 = vperm.xlu0 %831, %v706
        %v833 = vpop.permute.xlu0 %832
        %836 = vset.pattern.permute.xlu0 4
        %837 = vperm.xlu0 %836, %v707
        %v838 = vpop.permute.xlu0 %837
        %841 = vset.pattern.permute.xlu0 4
        %842 = vperm.xlu0 %841, %v708
        %v843 = vpop.permute.xlu0 %842
        %846 = vset.pattern.permute.xlu0 4
        %847 = vperm.xlu0 %846, %v709
        %v848 = vpop.permute.xlu0 %847
        %851 = vset.pattern.permute.xlu0 4
        %852 = vperm.xlu0 %851, %v710
        %v853 = vpop.permute.xlu0 %852
        %856 = vset.pattern.permute.xlu0 4
        %857 = vperm.xlu0 %856, %v711
        %v858 = vpop.permute.xlu0 %857
        %861 = vset.pattern.permute.xlu0 4
        %862 = vperm.xlu0 %861, %v712
        %v863 = vpop.permute.xlu0 %862
        %866 = vset.pattern.permute.xlu0 4
        %867 = vperm.xlu0 %866, %v713
        %v868 = vpop.permute.xlu0 %867
        %871 = vset.pattern.permute.xlu0 4
        %872 = vperm.xlu0 %871, %v714
        %v873 = vpop.permute.xlu0 %872
        %876 = vset.pattern.permute.xlu0 4
        %877 = vperm.xlu0 %876, %v715
        %v878 = vpop.permute.xlu0 %877
        %881 = vset.pattern.permute.xlu0 4
        %882 = vperm.xlu0 %881, %v716
        %v883 = vpop.permute.xlu0 %882
        %886 = vset.pattern.permute.xlu0 4
        %887 = vperm.xlu0 %886, %v717
        %v888 = vpop.permute.xlu0 %887
        %891 = vset.pattern.permute.xlu0 4
        %892 = vperm.xlu0 %891, %v718
        %v893 = vpop.permute.xlu0 %892
        %v895 = vsub.f32 %v799, %v818
        %v896 = vsub.f32 %v800, %v823
        %v897 = vsub.f32 %v801, %v828
        %v898 = vsub.f32 %v802, %v833
        %v899 = vsub.f32 %v803, %v838
        %v900 = vsub.f32 %v804, %v843
        %v901 = vsub.f32 %v805, %v848
        %v902 = vsub.f32 %v806, %v853
        %v903 = vsub.f32 %v807, %v858
        %v904 = vsub.f32 %v808, %v863
        %v905 = vsub.f32 %v809, %v868
        %v906 = vsub.f32 %v810, %v873
        %v907 = vsub.f32 %v811, %v878
        %v908 = vsub.f32 %v812, %v883
        %v909 = vsub.f32 %v813, %v888
        %v910 = vsub.f32 %v814, %v893
        %911 = vst [vmem:[%s272] sm:$0xff] %v895
        %912 = vst [vmem:[%s272 + $0x8] sm:$0xff] %v896
        %913 = vst [vmem:[%s272 + $0x10] sm:$0xff] %v897
        %914 = vst [vmem:[%s272 + $0x18] sm:$0xff] %v898
        %915 = vst [vmem:[%s272 + $0x20] sm:$0xff] %v899
        %916 = vst [vmem:[%s272 + $0x28] sm:$0xff] %v900
        %917 = vst [vmem:[%s272 + $0x30] sm:$0xff] %v901
        %918 = vst [vmem:[%s272 + $0x38] sm:$0xff] %v902
        %919 = vst [vmem:[%s272 + $0x40] sm:$0xff] %v903
        %920 = vst [vmem:[%s272 + $0x48] sm:$0xff] %v904
        %921 = vst [vmem:[%s272 + $0x50] sm:$0xff] %v905
        %922 = vst [vmem:[%s272 + $0x58] sm:$0xff] %v906
        %923 = vst [vmem:[%s272 + $0x60] sm:$0xff] %v907
        %924 = vst [vmem:[%s272 + $0x68] sm:$0xff] %v908
        %925 = vst [vmem:[%s272 + $0x70] sm:$0xff] %v909
        %926 = vst [vmem:[%s272 + $0x78] sm:$0xff] %v910
        %s927 = sand.u32 %s181, 1
        %s928 = scalar_lea.sflag [#allocation3], %s927
        %s929 = sand.u32 %s181, 1
        %s930 = smul.addr %s929, 128
        %s931 = scalar_lea.vmem [#allocation2], %s930
        // Predicated region
        $region49: #{tpu_custom_call.1} parent=47 // pred_check
          %p932 = pneg %p191
        $region50: #{tpu_custom_call.1} parent=47 // pred_check_branch
          %934 = sbr.rel (%p932) target = $region52
        $region51: #{tpu_custom_call.1} parent=47 // pred_region
          %s935 = smul.u32 16, %s21
          %937 = vsyncadd %s928, 0
          %s938 = smul.addr %s935, 8
          %s939 = scalar_lea.hbm %s7, %s938
          %s940 = sshll.u32 %s931, 4
          %s941 = int_to_ptr.vmem [resolvable:$true] %s940
          %s942 = sshll.u32 %s939, 4
          %s943 = int_to_ptr.hbm [resolvable:$true] %s942
          %948 = dma.vmem_to_hbm [thread:$0]  %s941, 2048, %s943, %s928, 128, 128, 8
        $region52: #{tpu_custom_call.1} parent=47 // pred_fallthru
          _
      $region48: #{tpu_custom_call.1} parent=5 // pred_fallthru
        _
      %p949 = scmp.le.s32.totalorder 2, %s16
      // Predicated region
      $region53: #{tpu_custom_call.1} parent=5 // pred_check
        %p950 = pneg %p949
      $region54: #{tpu_custom_call.1} parent=5 // pred_check_branch
        %952 = sbr.rel (%p950) target = $region56
      $region55: #{tpu_custom_call.1} parent=5 // pred_region
        %s953 = ssub.s32 %s16, 2
        // Predicated region
        $region57: #{tpu_custom_call.1} parent=55 // pred_check
          %p954 = pneg %p197
        $region58: #{tpu_custom_call.1} parent=55 // pred_check_branch
          %956 = sbr.rel (%p954) target = $region60
        $region59: #{tpu_custom_call.1} parent=55 // pred_region
          %s957 = sand.u32 %s182, 1
          %s958 = scalar_lea.sflag [#allocation3], %s957
          %s959 = sand.u32 %s182, 1
          %s960 = smul.addr %s959, 128
          %s961 = scalar_lea.vmem [#allocation2], %s960
          %963 = dma.done %s958, 2048
        $region60: #{tpu_custom_call.1} parent=55 // pred_fallthru
          _
      $region56: #{tpu_custom_call.1} parent=5 // pred_fallthru
        _
    $region6: #{tpu_custom_call.1} parent=1 // loop_footer
      %s20 = sadd.s32 1, %s16
    $region7: #{tpu_custom_call.1} parent=1 // loop_footer_branch
      %15 = sbr.rel target = $region3
    $region8: #{tpu_custom_call.1} parent=1 // loop_exit
      _
    %964 = vsyncpa [#allocation3], 1
    %s965 = scalar_lea.sflag [#allocation3], 1
    %966 = vsyncpa %s965, 1

</llo_original>
